<compile_context>
chip_gen: v7x
topology: tpu7x:2x2x1
jax: 0.10.0
libtpu: 0.0.40
codegen_flags: <defaults>
</compile_context>

<pallas_src>
import jax
import jax.numpy as jnp
from jax.experimental import pallas as pl
from jax.experimental.pallas import tpu as pltpu

LATENT_SIZE = 4
NUM_ACTIONS = 4
HIDDEN = 16
LRELU_SLOPE = 0.2

LANES = 128
PACK = LANES // LATENT_SIZE           # 32 logical rows per packed 128-lane row
Z_W = PACK * LATENT_SIZE              # 128  (packed z / output width)
A_W = PACK * NUM_ACTIONS              # 128  (packed action width)
H_W = PACK * HIDDEN                   # 512  (packed hidden width)

MAX_TB = 2048                         # packed rows per grid step (= 65536 logical rows)


# ----------------------------------------------------------------------------
# Fused kernel: fc1 (cat-free) + LeakyReLU(0.2) + fc2 + tanh + residual,
# all on the lane-dense packed layout.
# ----------------------------------------------------------------------------
def transition_kernel(zp_ref, ap_ref, w1z_ref, w1a_ref, w2_ref, o_ref):
    """zp_ref  : (tb, 128)  packed latent block (32 logical rows / packed row)
       ap_ref  : (tb, 128)  packed action block
       w1z_ref : (128, 512) block-diagonal fc1 weights acting on z
       w1a_ref : (128, 512) block-diagonal fc1 weights acting on actions
       w2_ref  : (512, 128) block-diagonal fc2 weights
       o_ref   : (tb, 128)  packed  z + tanh(fc2(leaky_relu(fc1(cat(z, a)))))
    """
    z = zp_ref[...]
    h = jnp.dot(z, w1z_ref[...], preferred_element_type=jnp.float32)
    h = h + jnp.dot(ap_ref[...], w1a_ref[...], preferred_element_type=jnp.float32)
    h = jnp.maximum(h, LRELU_SLOPE * h)                       # LeakyReLU(0.2)
    d = jnp.dot(h, w2_ref[...], preferred_element_type=jnp.float32)
    o_ref[...] = (z + jnp.tanh(d)).astype(o_ref.dtype)        # residual


def _pick_tile(bp):
    """Packed-row tile: multiple of 8, capped at MAX_TB, and <= ceil(bp/2) so
    the grid has >= 2 parallel steps whenever bp is big enough (v7x megacore)."""
    if bp <= 16:
        return bp                       # single full-extent block
    tb = min(MAX_TB, pl.cdiv(bp, 2))
    tb = ((tb + 7) // 8) * 8            # 8-sublane alignment
    return min(tb, MAX_TB)


# ----------------------------------------------------------------------------
# Wrapper
# ----------------------------------------------------------------------------
def transition_forward(z, actions, fc1_w, fc2_w):
    """z: (B, 4), actions: (B, 4); fc1_w: (16, 8), fc2_w: (4, 16) (torch layout)."""
    B, L = z.shape
    A = actions.shape[1]
    H = fc1_w.shape[0]
    assert L == LATENT_SIZE and A == NUM_ACTIONS and H == HIDDEN

    # Split fc1 so torch.cat never materializes, then build the block-diagonal
    # (lane-dense) weights once at trace time.
    w1_t = fc1_w.T                                  # (L+A, H)
    eye = jnp.eye(PACK, dtype=z.dtype)
    w1z_bd = jnp.kron(eye, w1_t[:L])                # (128, 512)
    w1a_bd = jnp.kron(eye, w1_t[L:])                # (128, 512)
    w2_bd = jnp.kron(eye, fc2_w.T)                  # (512, 128)

    # Lane-dense packing: 32 logical rows per 128-lane row (row-major reshape,
    # free).  Only pad by <=31 rows to reach a multiple of 32.
    pad_rows = (-B) % PACK
    if pad_rows:
        z_in = jnp.pad(z, ((0, pad_rows), (0, 0)))
        a_in = jnp.pad(actions, ((0, pad_rows), (0, 0)))
    else:
        z_in, a_in = z, actions
    bp = (B + pad_rows) // PACK
    zp = z_in.reshape(bp, Z_W)
    ap = a_in.reshape(bp, A_W)

    tb = _pick_tile(bp)
    grid = (pl.cdiv(bp, tb),)           # partial last block handled by Pallas masking

    logical_rows = bp * PACK
    out_packed = pl.pallas_call(
        transition_kernel,
        out_shape=jax.ShapeDtypeStruct((bp, Z_W), z.dtype),
        grid=grid,
        in_specs=[
            pl.BlockSpec((tb, Z_W), lambda i: (i, 0)),    # packed z tile
            pl.BlockSpec((tb, A_W), lambda i: (i, 0)),    # packed action tile
            pl.BlockSpec((Z_W, H_W), lambda i: (0, 0)),   # weights: VMEM-resident
            pl.BlockSpec((A_W, H_W), lambda i: (0, 0)),
            pl.BlockSpec((H_W, Z_W), lambda i: (0, 0)),
        ],
        out_specs=pl.BlockSpec((tb, Z_W), lambda i: (i, 0)),
        compiler_params=pltpu.CompilerParams(
            dimension_semantics=("parallel",),            # shard batch over TCs (v7x)
            vmem_limit_bytes=32 * 1024 * 1024,            # explicit, safe on all chips
        ),
        cost_estimate=pl.CostEstimate(
            flops=int(384 * logical_rows),
            transcendentals=int(4 * logical_rows),
            bytes_accessed=int(48 * logical_rows),
        ),
    )(zp, ap, w1z_bd, w1a_bd, w2_bd)

    out = out_packed.reshape(logical_rows, L)
    return out[:B] if pad_rows else out


# ----------------------------------------------------------------------------
# Pure-JAX reference (mirrors the PyTorch forward)
# ----------------------------------------------------------------------------
def transition_reference(z, actions, fc1_w, fc2_w):
    x = jnp.concatenate([z, actions], axis=1)
    x = x @ fc1_w.T
    x = jnp.where(x > 0, x, LRELU_SLOPE * x)
    x = x @ fc2_w.T
    return z + jnp.tanh(x)


# ----------------------------------------------------------------------------
# Deterministic parameter init (shapes follow the PyTorch __init__, bias=False)
# ----------------------------------------------------------------------------
def init_params(key):
    k1, k2 = jax.random.split(key)
    fan1 = LATENT_SIZE + NUM_ACTIONS
    lim1 = 1.0 / float(fan1) ** 0.5
    lim2 = 1.0 / float(HIDDEN) ** 0.5
    fc1_w = jax.random.uniform(k1, (HIDDEN, fan1), jnp.float32, -lim1, lim1)
    fc2_w = jax.random.uniform(k2, (LATENT_SIZE, HIDDEN), jnp.float32, -lim2, lim2)
    return fc1_w, fc2_w


if __name__ == "__main__":
    key = jax.random.PRNGKey(0)
    pkey, zkey, akey = jax.random.split(key, 3)
    fc1_w, fc2_w = init_params(pkey)

    # Small-shape test (batch=2): pads to one packed 128-lane row, grid=1.
    z = jax.random.normal(zkey, (2, LATENT_SIZE), jnp.float32)
    a = jax.random.normal(akey, (2, NUM_ACTIONS), jnp.float32)
    out = jax.block_until_ready(transition_forward(z, a, fc1_w, fc2_w))
    ref = transition_reference(z, a, fc1_w, fc2_w)
    assert out.shape == (2, LATENT_SIZE), out.shape
    assert jnp.allclose(out, ref, rtol=2e-3, atol=2e-3)

    # Ragged large batch: exercises multi-step grid and the masked partial
    # last block (B=70000 -> 2188 packed rows, grid of 2 with a partial tail).
    B = 70000
    zb = jax.random.normal(zkey, (B, LATENT_SIZE), jnp.float32)
    ab = jax.random.normal(akey, (B, NUM_ACTIONS), jnp.float32)
    outb = jax.block_until_ready(transition_forward(zb, ab, fc1_w, fc2_w))
    refb = transition_reference(zb, ab, fc1_w, fc2_w)
    assert outb.shape == (B, LATENT_SIZE), outb.shape
    assert jnp.allclose(outb, refb, rtol=2e-3, atol=2e-3)

    print("KERNEL_OK")
</pallas_src>

<mosaic_0001>
module attributes {stable_mosaic.version = 11 : i64} {
  func.func @transition_kernel(%arg0: i32, %arg1: memref<1x128xf32, #tpu.memory_space<vmem>>, %arg2: memref<1x128xf32, #tpu.memory_space<vmem>>, %arg3: memref<128x512xf32, #tpu.memory_space<vmem>>, %arg4: memref<128x512xf32, #tpu.memory_space<vmem>>, %arg5: memref<512x128xf32, #tpu.memory_space<vmem>>, %arg6: memref<1x128xf32, #tpu.memory_space<vmem>>) attributes {dimension_semantics = [#tpu.dimension_semantics<parallel>], iteration_bounds = array<i64: 1>, scalar_prefetch = 0 : i64, scratch_operands = 0 : i64, tpu.core_type = #tpu.core_type<tc>, window_params = [{transform_indices = @transform_0, window_bounds = array<i64: 1, 128>}, {transform_indices = @transform_1, window_bounds = array<i64: 1, 128>}, {pipeline_mode = #tpu.pipeline_mode<synchronous>, transform_indices = @transform_2, window_bounds = array<i64: 128, 512>}, {pipeline_mode = #tpu.pipeline_mode<synchronous>, transform_indices = @transform_3, window_bounds = array<i64: 128, 512>}, {pipeline_mode = #tpu.pipeline_mode<synchronous>, transform_indices = @transform_4, window_bounds = array<i64: 512, 128>}, {transform_indices = @transform_5, window_bounds = array<i64: 1, 128>}]} {
    %c0 = arith.constant 0 : index
    %c0_0 = arith.constant 0 : index
    %0 = vector.load %arg1[%c0, %c0_0] : memref<1x128xf32, #tpu.memory_space<vmem>>, vector<1x128xf32>
    %c0_1 = arith.constant 0 : index
    %c0_2 = arith.constant 0 : index
    %1 = vector.load %arg3[%c0_1, %c0_2] : memref<128x512xf32, #tpu.memory_space<vmem>>, vector<128x512xf32>
    %cst = arith.constant dense<0.000000e+00> : vector<1x512xf32>
    %2 = tpu.matmul %0, %1, %cst {dimension_numbers = #tpu.dot_dimension_numbers<[1], [0], [0], [1], [0, 0, 1, 1], [], []>} : vector<1x128xf32>, vector<128x512xf32>, vector<1x512xf32> -> vector<1x512xf32>
    %c0_3 = arith.constant 0 : index
    %c0_4 = arith.constant 0 : index
    %3 = vector.load %arg2[%c0_3, %c0_4] : memref<1x128xf32, #tpu.memory_space<vmem>>, vector<1x128xf32>
    %c0_5 = arith.constant 0 : index
    %c0_6 = arith.constant 0 : index
    %4 = vector.load %arg4[%c0_5, %c0_6] : memref<128x512xf32, #tpu.memory_space<vmem>>, vector<128x512xf32>
    %cst_7 = arith.constant dense<0.000000e+00> : vector<1x512xf32>
    %5 = tpu.matmul %3, %4, %cst_7 {dimension_numbers = #tpu.dot_dimension_numbers<[1], [0], [0], [1], [0, 0, 1, 1], [], []>} : vector<1x128xf32>, vector<128x512xf32>, vector<1x512xf32> -> vector<1x512xf32>
    %6 = arith.addf %2, %5 : vector<1x512xf32>
    %cst_8 = arith.constant 2.000000e-01 : f32
    %7 = vector.broadcast %cst_8 : f32 to vector<1x512xf32>
    %8 = arith.mulf %7, %6 : vector<1x512xf32>
    %9 = arith.maximumf %6, %8 : vector<1x512xf32>
    %c0_9 = arith.constant 0 : index
    %c0_10 = arith.constant 0 : index
    %10 = vector.load %arg5[%c0_9, %c0_10] : memref<512x128xf32, #tpu.memory_space<vmem>>, vector<512x128xf32>
    %cst_11 = arith.constant dense<0.000000e+00> : vector<1x128xf32>
    %11 = tpu.matmul %9, %10, %cst_11 {dimension_numbers = #tpu.dot_dimension_numbers<[1], [0], [0], [1], [0, 0, 1, 1], [], []>} : vector<1x512xf32>, vector<512x128xf32>, vector<1x128xf32> -> vector<1x128xf32>
    %12 = math.tanh %11 : vector<1x128xf32>
    %13 = arith.addf %0, %12 : vector<1x128xf32>
    %c0_12 = arith.constant 0 : index
    %c0_13 = arith.constant 0 : index
    %14 = vector.load %arg6[%c0_12, %c0_13] : memref<1x128xf32, #tpu.memory_space<vmem>>, vector<1x128xf32>
    tpu.vector_store %arg6[%c0_12, %c0_13], %13 {strides = array<i32>} : memref<1x128xf32, #tpu.memory_space<vmem>>, vector<1x128xf32>,
    return
  }
  func.func @transform_0(%arg0: i32) -> (i32, i32) {
    %c0_i32 = arith.constant 0 : i32
    %c0_i32_0 = arith.constant 0 : i32
    return %arg0, %c0_i32 : i32, i32
  }
  func.func @transform_1(%arg0: i32) -> (i32, i32) {
    %c0_i32 = arith.constant 0 : i32
    %c0_i32_0 = arith.constant 0 : i32
    return %arg0, %c0_i32 : i32, i32
  }
  func.func @transform_2(%arg0: i32) -> (i32, i32) {
    %c0_i32 = arith.constant 0 : i32
    %c0_i32_0 = arith.constant 0 : i32
    %c0_i32_1 = arith.constant 0 : i32
    return %c0_i32, %c0_i32_0 : i32, i32
  }
  func.func @transform_3(%arg0: i32) -> (i32, i32) {
    %c0_i32 = arith.constant 0 : i32
    %c0_i32_0 = arith.constant 0 : i32
    %c0_i32_1 = arith.constant 0 : i32
    return %c0_i32, %c0_i32_0 : i32, i32
  }
  func.func @transform_4(%arg0: i32) -> (i32, i32) {
    %c0_i32 = arith.constant 0 : i32
    %c0_i32_0 = arith.constant 0 : i32
    %c0_i32_1 = arith.constant 0 : i32
    return %c0_i32, %c0_i32_0 : i32, i32
  }
  func.func @transform_5(%arg0: i32) -> (i32, i32) {
    %c0_i32 = arith.constant 0 : i32
    %c0_i32_0 = arith.constant 0 : i32
    return %arg0, %c0_i32 : i32, i32
  }
}

</mosaic_0001>

<llo_original>
// kernel: tpu_custom_call.1
$region0: #{tpu_custom_call.1}
  #allocation0 [shape = 'u32[]', space=smem, size = 0x4, offset = 0x4, fixed_abs, tag = 'smem constant byte address 0x4 - core index']
  #allocation1 [shape = 'u32[144,128]{1,0:T(1,128)}', space=vmem, size = 0x12000, scoped, tag = 'internal scratch']
  %s0 = inlined_call_operand.hbm [shape: f32[1,128], index: 0, kind: input, shape index: {}]
  %s1 = inlined_call_operand.vmem [shape: f32[1,128], index: 1, kind: input, shape index: {}]
  %s2 = inlined_call_operand.hbm [shape: f32[128,512], index: 2, kind: input, shape index: {}]
  %s3 = inlined_call_operand.hbm [shape: f32[128,512], index: 3, kind: input, shape index: {}]
  %s4 = inlined_call_operand.hbm [shape: f32[512,128], index: 4, kind: input, shape index: {}]
  %s5 = inlined_call_operand.hbm [shape: f32[1,128], index: 5, kind: output, shape index: {}]
  %s6 = sld [smem:[#allocation0]]
  $region46: #{tpu_custom_call.1} parent=0
    _
  %s8 = ssub.s32 1, %s6
  %s9 = scalar_select 0, %s8, %s6
  $region1: #{tpu_custom_call.1} parent=0
    #allocation2 [shape = 'u8[512]{0}', space=vmem, size = 0x400, scoped, tag = 'input window, operand 0, single buffered']
    #allocation3 [shape = 's32[1]{0}', space=sflag, size = 0x4, scoped, tag = 'scoped memory for tpu_custom_call.1']
    #allocation4 [shape = 's32[1]{0}', space=sflag, size = 0x4, scoped, tag = 'scoped memory for tpu_custom_call.1']
    #allocation5 [shape = 'u8[262144]{0}', space=vmem, size = 0x40000, scoped, tag = 'input window, operand 2, single buffered']
    #allocation6 [shape = 's32[1]{0}', space=sflag, size = 0x4, scoped, tag = 'scoped memory for tpu_custom_call.1']
    #allocation7 [shape = 'u8[262144]{0}', space=vmem, size = 0x40000, scoped, tag = 'input window, operand 3, single buffered']
    #allocation8 [shape = 'u8[262144]{0}', space=vmem, size = 0x40000, scoped, tag = 'input window, operand 4, single buffered']
    #allocation9 [shape = 's32[1]{0}', space=sflag, size = 0x4, scoped, tag = 'scoped memory for tpu_custom_call.1']
    #allocation10 [shape = 'u8[512]{0}', space=vmem, size = 0x400, scoped, tag = 'output window, operand 0, single buffered']
    %10 = vsyncpa [#allocation3], 0
    %11 = vsyncpa [#allocation6], 0
    %12 = vsyncpa [#allocation9], 0
    %13 = vsyncpa [#allocation4], 0
    // Predicated region
    $region2: #{tpu_custom_call.1} parent=1 // pred_check
      _
    $region3: #{tpu_custom_call.1} parent=1 // pred_check_branch
      %15 = sbr.rel (0) target = $region5
    $region4: #{tpu_custom_call.1} parent=1 // pred_region
      %s17 = ssub.s32 16, 16
      %18 = vsyncadd [#allocation3], %s17
      %s20 = sshll.u32 [#allocation2], 4
      %s21 = int_to_ptr.vmem [resolvable:$true] %s20
      %23 = dma.hbm_to_vmem [thread:$0]  %s0, 16, %s21, [#allocation3]
    $region5: #{tpu_custom_call.1} parent=1 // pred_fallthru
      _
    // Predicated region
    $region6: #{tpu_custom_call.1} parent=1 // pred_check
      _
    $region7: #{tpu_custom_call.1} parent=1 // pred_check_branch
      %25 = sbr.rel (0) target = $region9
    $region8: #{tpu_custom_call.1} parent=1 // pred_region
      _
    $region9: #{tpu_custom_call.1} parent=1 // pred_fallthru
      _
    // Predicated region
    $region10: #{tpu_custom_call.1} parent=1 // pred_check
      _
    $region11: #{tpu_custom_call.1} parent=1 // pred_check_branch
      %27 = sbr.rel (0) target = $region13
    $region12: #{tpu_custom_call.1} parent=1 // pred_region
      %s29 = ssub.s32 8192, 8192
      %30 = vsyncadd [#allocation6], %s29
      %s31 = sshll.u32 [#allocation5], 4
      %s32 = int_to_ptr.vmem [resolvable:$true] %s31
      %37 = dma.hbm_to_vmem [thread:$0]  %s2, 8192, %s32, [#allocation6], 512, 512, 32
    $region13: #{tpu_custom_call.1} parent=1 // pred_fallthru
      _
    // Predicated region
    $region14: #{tpu_custom_call.1} parent=1 // pred_check
      _
    $region15: #{tpu_custom_call.1} parent=1 // pred_check_branch
      %39 = sbr.rel (0) target = $region17
    $region16: #{tpu_custom_call.1} parent=1 // pred_region
      %s41 = ssub.s32 8192, 8192
      %42 = vsyncadd [#allocation6], %s41
      %s43 = sshll.u32 [#allocation7], 4
      %s44 = int_to_ptr.vmem [resolvable:$true] %s43
      %49 = dma.hbm_to_vmem [thread:$0]  %s3, 8192, %s44, [#allocation6], 512, 512, 32
    $region17: #{tpu_custom_call.1} parent=1 // pred_fallthru
      _
    // Predicated region
    $region18: #{tpu_custom_call.1} parent=1 // pred_check
      _
    $region19: #{tpu_custom_call.1} parent=1 // pred_check_branch
      %51 = sbr.rel (0) target = $region21
    $region20: #{tpu_custom_call.1} parent=1 // pred_region
      %s53 = ssub.s32 8192, 8192
      %54 = vsyncadd [#allocation9], %s53
      %s55 = sshll.u32 [#allocation8], 4
      %s56 = int_to_ptr.vmem [resolvable:$true] %s55
      %61 = dma.hbm_to_vmem [thread:$0]  %s4, 8192, %s56, [#allocation9], 128, 128, 8
    $region21: #{tpu_custom_call.1} parent=1 // pred_fallthru
      _
    // Predicated region
    $region22: #{tpu_custom_call.1} parent=1 // pred_check
      _
    $region23: #{tpu_custom_call.1} parent=1 // pred_check_branch
      %63 = sbr.rel (0) target = $region25
    $region24: #{tpu_custom_call.1} parent=1 // pred_region
      %64 = dma.done [#allocation3], 16
    $region25: #{tpu_custom_call.1} parent=1 // pred_fallthru
      _
    // Predicated region
    $region26: #{tpu_custom_call.1} parent=1 // pred_check
      _
    $region27: #{tpu_custom_call.1} parent=1 // pred_check_branch
      %66 = sbr.rel (0) target = $region29
    $region28: #{tpu_custom_call.1} parent=1 // pred_region
      %67 = dma.done [#allocation6], 8192
    $region29: #{tpu_custom_call.1} parent=1 // pred_fallthru
      _
    // Predicated region
    $region30: #{tpu_custom_call.1} parent=1 // pred_check
      _
    $region31: #{tpu_custom_call.1} parent=1 // pred_check_branch
      %69 = sbr.rel (0) target = $region33
    $region32: #{tpu_custom_call.1} parent=1 // pred_region
      %70 = dma.done [#allocation6], 8192
    $region33: #{tpu_custom_call.1} parent=1 // pred_fallthru
      _
    // Predicated region
    $region34: #{tpu_custom_call.1} parent=1 // pred_check
      _
    $region35: #{tpu_custom_call.1} parent=1 // pred_check_branch
      %72 = sbr.rel (0) target = $region37
    $region36: #{tpu_custom_call.1} parent=1 // pred_region
      %73 = dma.done [#allocation9], 8192
    $region37: #{tpu_custom_call.1} parent=1 // pred_fallthru
      _
    %v74 = vld [vmem:[#allocation2] sm:$0x1]
    %v75 = vld [vmem:[#allocation5] sm:$0xff]
    %v76 = vld [vmem:[#allocation5 + $0x8] sm:$0xff]
    %v77 = vld [vmem:[#allocation5 + $0x10] sm:$0xff]
    %v78 = vld [vmem:[#allocation5 + $0x18] sm:$0xff]
    %v79 = vld [vmem:[#allocation5 + $0x20] sm:$0xff]
    %v80 = vld [vmem:[#allocation5 + $0x28] sm:$0xff]
    %v81 = vld [vmem:[#allocation5 + $0x30] sm:$0xff]
    %v82 = vld [vmem:[#allocation5 + $0x38] sm:$0xff]
    %v83 = vld [vmem:[#allocation5 + $0x40] sm:$0xff]
    %v84 = vld [vmem:[#allocation5 + $0x48] sm:$0xff]
    %v85 = vld [vmem:[#allocation5 + $0x50] sm:$0xff]
    %v86 = vld [vmem:[#allocation5 + $0x58] sm:$0xff]
    %v87 = vld [vmem:[#allocation5 + $0x60] sm:$0xff]
    %v88 = vld [vmem:[#allocation5 + $0x68] sm:$0xff]
    %v89 = vld [vmem:[#allocation5 + $0x70] sm:$0xff]
    %v90 = vld [vmem:[#allocation5 + $0x78] sm:$0xff]
    %v91 = vld [vmem:[#allocation5 + $0x80] sm:$0xff]
    %v92 = vld [vmem:[#allocation5 + $0x88] sm:$0xff]
    %v93 = vld [vmem:[#allocation5 + $0x90] sm:$0xff]
    %v94 = vld [vmem:[#allocation5 + $0x98] sm:$0xff]
    %v95 = vld [vmem:[#allocation5 + $0xa0] sm:$0xff]
    %v96 = vld [vmem:[#allocation5 + $0xa8] sm:$0xff]
    %v97 = vld [vmem:[#allocation5 + $0xb0] sm:$0xff]
    %v98 = vld [vmem:[#allocation5 + $0xb8] sm:$0xff]
    %v99 = vld [vmem:[#allocation5 + $0xc0] sm:$0xff]
    %v100 = vld [vmem:[#allocation5 + $0xc8] sm:$0xff]
    %v101 = vld [vmem:[#allocation5 + $0xd0] sm:$0xff]
    %v102 = vld [vmem:[#allocation5 + $0xd8] sm:$0xff]
    %v103 = vld [vmem:[#allocation5 + $0xe0] sm:$0xff]
    %v104 = vld [vmem:[#allocation5 + $0xe8] sm:$0xff]
    %v105 = vld [vmem:[#allocation5 + $0xf0] sm:$0xff]
    %v106 = vld [vmem:[#allocation5 + $0xf8] sm:$0xff]
    %v107 = vld [vmem:[#allocation5 + $0x100] sm:$0xff]
    %v108 = vld [vmem:[#allocation5 + $0x108] sm:$0xff]
    %v109 = vld [vmem:[#allocation5 + $0x110] sm:$0xff]
    %v110 = vld [vmem:[#allocation5 + $0x118] sm:$0xff]
    %v111 = vld [vmem:[#allocation5 + $0x120] sm:$0xff]
    %v112 = vld [vmem:[#allocation5 + $0x128] sm:$0xff]
    %v113 = vld [vmem:[#allocation5 + $0x130] sm:$0xff]
    %v114 = vld [vmem:[#allocation5 + $0x138] sm:$0xff]
    %v115 = vld [vmem:[#allocation5 + $0x140] sm:$0xff]
    %v116 = vld [vmem:[#allocation5 + $0x148] sm:$0xff]
    %v117 = vld [vmem:[#allocation5 + $0x150] sm:$0xff]
    %v118 = vld [vmem:[#allocation5 + $0x158] sm:$0xff]
    %v119 = vld [vmem:[#allocation5 + $0x160] sm:$0xff]
    %v120 = vld [vmem:[#allocation5 + $0x168] sm:$0xff]
    %v121 = vld [vmem:[#allocation5 + $0x170] sm:$0xff]
    %v122 = vld [vmem:[#allocation5 + $0x178] sm:$0xff]
    %v123 = vld [vmem:[#allocation5 + $0x180] sm:$0xff]
    %v124 = vld [vmem:[#allocation5 + $0x188] sm:$0xff]
    %v125 = vld [vmem:[#allocation5 + $0x190] sm:$0xff]
    %v126 = vld [vmem:[#allocation5 + $0x198] sm:$0xff]
    %v127 = vld [vmem:[#allocation5 + $0x1a0] sm:$0xff]
    %v128 = vld [vmem:[#allocation5 + $0x1a8] sm:$0xff]
    %v129 = vld [vmem:[#allocation5 + $0x1b0] sm:$0xff]
    %v130 = vld [vmem:[#allocation5 + $0x1b8] sm:$0xff]
    %v131 = vld [vmem:[#allocation5 + $0x1c0] sm:$0xff]
    %v132 = vld [vmem:[#allocation5 + $0x1c8] sm:$0xff]
    %v133 = vld [vmem:[#allocation5 + $0x1d0] sm:$0xff]
    %v134 = vld [vmem:[#allocation5 + $0x1d8] sm:$0xff]
    %v135 = vld [vmem:[#allocation5 + $0x1e0] sm:$0xff]
    %v136 = vld [vmem:[#allocation5 + $0x1e8] sm:$0xff]
    %v137 = vld [vmem:[#allocation5 + $0x1f0] sm:$0xff]
    %v138 = vld [vmem:[#allocation5 + $0x1f8] sm:$0xff]
    %v139 = vld [vmem:[%s1] sm:$0x1]
    %v140 = vld [vmem:[#allocation7] sm:$0xff]
    %v141 = vld [vmem:[#allocation7 + $0x8] sm:$0xff]
    %v142 = vld [vmem:[#allocation7 + $0x10] sm:$0xff]
    %v143 = vld [vmem:[#allocation7 + $0x18] sm:$0xff]
    %v144 = vld [vmem:[#allocation7 + $0x20] sm:$0xff]
    %v145 = vld [vmem:[#allocation7 + $0x28] sm:$0xff]
    %v146 = vld [vmem:[#allocation7 + $0x30] sm:$0xff]
    %v147 = vld [vmem:[#allocation7 + $0x38] sm:$0xff]
    %v148 = vld [vmem:[#allocation7 + $0x40] sm:$0xff]
    %v149 = vld [vmem:[#allocation7 + $0x48] sm:$0xff]
    %v150 = vld [vmem:[#allocation7 + $0x50] sm:$0xff]
    %v151 = vld [vmem:[#allocation7 + $0x58] sm:$0xff]
    %v152 = vld [vmem:[#allocation7 + $0x60] sm:$0xff]
    %v153 = vld [vmem:[#allocation7 + $0x68] sm:$0xff]
    %v154 = vld [vmem:[#allocation7 + $0x70] sm:$0xff]
    %v155 = vld [vmem:[#allocation7 + $0x78] sm:$0xff]
    %v156 = vld [vmem:[#allocation7 + $0x80] sm:$0xff]
    %v157 = vld [vmem:[#allocation7 + $0x88] sm:$0xff]
    %v158 = vld [vmem:[#allocation7 + $0x90] sm:$0xff]
    %v159 = vld [vmem:[#allocation7 + $0x98] sm:$0xff]
    %v160 = vld [vmem:[#allocation7 + $0xa0] sm:$0xff]
    %v161 = vld [vmem:[#allocation7 + $0xa8] sm:$0xff]
    %v162 = vld [vmem:[#allocation7 + $0xb0] sm:$0xff]
    %v163 = vld [vmem:[#allocation7 + $0xb8] sm:$0xff]
    %v164 = vld [vmem:[#allocation7 + $0xc0] sm:$0xff]
    %v165 = vld [vmem:[#allocation7 + $0xc8] sm:$0xff]
    %v166 = vld [vmem:[#allocation7 + $0xd0] sm:$0xff]
    %v167 = vld [vmem:[#allocation7 + $0xd8] sm:$0xff]
    %v168 = vld [vmem:[#allocation7 + $0xe0] sm:$0xff]
    %v169 = vld [vmem:[#allocation7 + $0xe8] sm:$0xff]
    %v170 = vld [vmem:[#allocation7 + $0xf0] sm:$0xff]
    %v171 = vld [vmem:[#allocation7 + $0xf8] sm:$0xff]
    %v172 = vld [vmem:[#allocation7 + $0x100] sm:$0xff]
    %v173 = vld [vmem:[#allocation7 + $0x108] sm:$0xff]
    %v174 = vld [vmem:[#allocation7 + $0x110] sm:$0xff]
    %v175 = vld [vmem:[#allocation7 + $0x118] sm:$0xff]
    %v176 = vld [vmem:[#allocation7 + $0x120] sm:$0xff]
    %v177 = vld [vmem:[#allocation7 + $0x128] sm:$0xff]
    %v178 = vld [vmem:[#allocation7 + $0x130] sm:$0xff]
    %v179 = vld [vmem:[#allocation7 + $0x138] sm:$0xff]
    %v180 = vld [vmem:[#allocation7 + $0x140] sm:$0xff]
    %v181 = vld [vmem:[#allocation7 + $0x148] sm:$0xff]
    %v182 = vld [vmem:[#allocation7 + $0x150] sm:$0xff]
    %v183 = vld [vmem:[#allocation7 + $0x158] sm:$0xff]
    %v184 = vld [vmem:[#allocation7 + $0x160] sm:$0xff]
    %v185 = vld [vmem:[#allocation7 + $0x168] sm:$0xff]
    %v186 = vld [vmem:[#allocation7 + $0x170] sm:$0xff]
    %v187 = vld [vmem:[#allocation7 + $0x178] sm:$0xff]
    %v188 = vld [vmem:[#allocation7 + $0x180] sm:$0xff]
    %v189 = vld [vmem:[#allocation7 + $0x188] sm:$0xff]
    %v190 = vld [vmem:[#allocation7 + $0x190] sm:$0xff]
    %v191 = vld [vmem:[#allocation7 + $0x198] sm:$0xff]
    %v192 = vld [vmem:[#allocation7 + $0x1a0] sm:$0xff]
    %v193 = vld [vmem:[#allocation7 + $0x1a8] sm:$0xff]
    %v194 = vld [vmem:[#allocation7 + $0x1b0] sm:$0xff]
    %v195 = vld [vmem:[#allocation7 + $0x1b8] sm:$0xff]
    %v196 = vld [vmem:[#allocation7 + $0x1c0] sm:$0xff]
    %v197 = vld [vmem:[#allocation7 + $0x1c8] sm:$0xff]
    %v198 = vld [vmem:[#allocation7 + $0x1d0] sm:$0xff]
    %v199 = vld [vmem:[#allocation7 + $0x1d8] sm:$0xff]
    %v200 = vld [vmem:[#allocation7 + $0x1e0] sm:$0xff]
    %v201 = vld [vmem:[#allocation7 + $0x1e8] sm:$0xff]
    %v202 = vld [vmem:[#allocation7 + $0x1f0] sm:$0xff]
    %v203 = vld [vmem:[#allocation7 + $0x1f8] sm:$0xff]
    %204 = vmatprep.subr.mxu0 %v141
    %205 = vmatpush1.msra.mxu0 %v140
    %206 = vmatprep.subr.mxu0 %v145
    %207 = vmatpush1.msra.mxu0 %v144
    %208 = vmatprep.subr.mxu0 %v149
    %209 = vmatpush1.msra.mxu0 %v148
    %210 = vmatprep.subr.mxu0 %v153
    %211 = vmatpush1.msra.mxu0 %v152
    %212 = vmatprep.subr.mxu0 %v157
    %213 = vmatpush1.msra.mxu0 %v156
    %214 = vmatprep.subr.mxu0 %v161
    %215 = vmatpush1.msra.mxu0 %v160
    %216 = vmatprep.subr.mxu0 %v165
    %217 = vmatpush1.msra.mxu0 %v164
    %218 = vmatprep.subr.mxu0 %v169
    %219 = vmatpush1.msra.mxu0 %v168
    %220 = vmatprep.subr.mxu0 %v173
    %221 = vmatpush1.msra.mxu0 %v172
    %222 = vmatprep.subr.mxu0 %v177
    %223 = vmatpush1.msra.mxu0 %v176
    %224 = vmatprep.subr.mxu0 %v181
    %225 = vmatpush1.msra.mxu0 %v180
    %226 = vmatprep.subr.mxu0 %v185
    %227 = vmatpush1.msra.mxu0 %v184
    %228 = vmatprep.subr.mxu0 %v189
    %229 = vmatpush1.msra.mxu0 %v188
    %230 = vmatprep.subr.mxu0 %v193
    %231 = vmatpush1.msra.mxu0 %v192
    %232 = vmatprep.subr.mxu0 %v197
    %233 = vmatpush1.msra.mxu0 %v196
    %234 = vmatprep.subr.mxu0 %v201
    %235 = vmatpush1.msra.mxu0 %v200
    %236 = vmatprep.subr.mxu0 0.0
    %237 = vmatpush1.msra.mxu0 0.0
    %238 = vmatprep.subr.mxu0 0.0
    %239 = vmatpush1.msra.mxu0 0.0
    %240 = vmatprep.subr.mxu0 0.0
    %241 = vmatpush1.msra.mxu0 0.0
    %242 = vmatprep.subr.mxu0 0.0
    %243 = vmatpush1.msra.mxu0 0.0
    %244 = vmatprep.subr.mxu0 0.0
    %245 = vmatpush1.msra.mxu0 0.0
    %246 = vmatprep.subr.mxu0 0.0
    %247 = vmatpush1.msra.mxu0 0.0
    %248 = vmatprep.subr.mxu0 0.0
    %249 = vmatpush1.msra.mxu0 0.0
    %250 = vmatprep.subr.mxu0 0.0
    %251 = vmatpush1.msra.mxu0 0.0
    %252 = vmatprep.subr.mxu0 0.0
    %253 = vmatpush1.msra.mxu0 0.0
    %254 = vmatprep.subr.mxu0 0.0
    %255 = vmatpush1.msra.mxu0 0.0
    %256 = vmatprep.subr.mxu0 0.0
    %257 = vmatpush1.msra.mxu0 0.0
    %258 = vmatprep.subr.mxu0 0.0
    %259 = vmatpush1.msra.mxu0 0.0
    %260 = vmatprep.subr.mxu0 0.0
    %261 = vmatpush1.msra.mxu0 0.0
    %262 = vmatprep.subr.mxu0 0.0
    %263 = vmatpush1.msra.mxu0 0.0
    %264 = vmatprep.subr.mxu0 0.0
    %265 = vmatpush1.msra.mxu0 0.0
    %266 = vmatprep.subr.mxu0 0.0
    %267 = vmatpush1.msra.mxu0 0.0
    %268 = vmatprep.mubr.f32.mxu0 0.0
    %269 = vmatmul.mubr.f32.gmra.mrb[0].mxu0 %v139
    %v270 = vpop.f32.mrb[0].mxu0
    %v271 = vadd.f32 0.0, %v270
    %v272 = vpop.f32.mrb[0].mxu0
    %v273 = vadd.f32 0.0, %v272
    %274 = vdwg.mxu0
    %275 = vmatprep.subr.mxu0 %v143
    %276 = vmatpush1.msra.mxu0 %v142
    %277 = vmatprep.subr.mxu0 %v147
    %278 = vmatpush1.msra.mxu0 %v146
    %279 = vmatprep.subr.mxu0 %v151
    %280 = vmatpush1.msra.mxu0 %v150
    %281 = vmatprep.subr.mxu0 %v155
    %282 = vmatpush1.msra.mxu0 %v154
    %283 = vmatprep.subr.mxu0 %v159
    %284 = vmatpush1.msra.mxu0 %v158
    %285 = vmatprep.subr.mxu0 %v163
    %286 = vmatpush1.msra.mxu0 %v162
    %287 = vmatprep.subr.mxu0 %v167
    %288 = vmatpush1.msra.mxu0 %v166
    %289 = vmatprep.subr.mxu0 %v171
    %290 = vmatpush1.msra.mxu0 %v170
    %291 = vmatprep.subr.mxu0 %v175
    %292 = vmatpush1.msra.mxu0 %v174
    %293 = vmatprep.subr.mxu0 %v179
    %294 = vmatpush1.msra.mxu0 %v178
    %295 = vmatprep.subr.mxu0 %v183
    %296 = vmatpush1.msra.mxu0 %v182
    %297 = vmatprep.subr.mxu0 %v187
    %298 = vmatpush1.msra.mxu0 %v186
    %299 = vmatprep.subr.mxu0 %v191
    %300 = vmatpush1.msra.mxu0 %v190
    %301 = vmatprep.subr.mxu0 %v195
    %302 = vmatpush1.msra.mxu0 %v194
    %303 = vmatprep.subr.mxu0 %v199
    %304 = vmatpush1.msra.mxu0 %v198
    %305 = vmatprep.subr.mxu0 %v203
    %306 = vmatpush1.msra.mxu0 %v202
    %307 = vmatprep.subr.mxu0 0.0
    %308 = vmatpush1.msra.mxu0 0.0
    %309 = vmatprep.subr.mxu0 0.0
    %310 = vmatpush1.msra.mxu0 0.0
    %311 = vmatprep.subr.mxu0 0.0
    %312 = vmatpush1.msra.mxu0 0.0
    %313 = vmatprep.subr.mxu0 0.0
    %314 = vmatpush1.msra.mxu0 0.0
    %315 = vmatprep.subr.mxu0 0.0
    %316 = vmatpush1.msra.mxu0 0.0
    %317 = vmatprep.subr.mxu0 0.0
    %318 = vmatpush1.msra.mxu0 0.0
    %319 = vmatprep.subr.mxu0 0.0
    %320 = vmatpush1.msra.mxu0 0.0
    %321 = vmatprep.subr.mxu0 0.0
    %322 = vmatpush1.msra.mxu0 0.0
    %323 = vmatprep.subr.mxu0 0.0
    %324 = vmatpush1.msra.mxu0 0.0
    %325 = vmatprep.subr.mxu0 0.0
    %326 = vmatpush1.msra.mxu0 0.0
    %327 = vmatprep.subr.mxu0 0.0
    %328 = vmatpush1.msra.mxu0 0.0
    %329 = vmatprep.subr.mxu0 0.0
    %330 = vmatpush1.msra.mxu0 0.0
    %331 = vmatprep.subr.mxu0 0.0
    %332 = vmatpush1.msra.mxu0 0.0
    %333 = vmatprep.subr.mxu0 0.0
    %334 = vmatpush1.msra.mxu0 0.0
    %335 = vmatprep.subr.mxu0 0.0
    %336 = vmatpush1.msra.mxu0 0.0
    %337 = vmatprep.subr.mxu0 0.0
    %338 = vmatpush1.msra.mxu0 0.0
    %339 = vmatprep.mubr.f32.mxu0 0.0
    %340 = vmatmul.mubr.f32.gmra.mrb[0].mxu0 %v139
    %v341 = vpop.f32.mrb[0].mxu0
    %v342 = vadd.f32 0.0, %v341
    %v343 = vpop.f32.mrb[0].mxu0
    %v344 = vadd.f32 0.0, %v343
    %345 = vdwg.mxu0
    %346 = vmatprep.subr.mxu0 %v76
    %347 = vmatpush1.msra.mxu0 %v75
    %348 = vmatprep.subr.mxu0 %v80
    %349 = vmatpush1.msra.mxu0 %v79
    %350 = vmatprep.subr.mxu0 %v84
    %351 = vmatpush1.msra.mxu0 %v83
    %352 = vmatprep.subr.mxu0 %v88
    %353 = vmatpush1.msra.mxu0 %v87
    %354 = vmatprep.subr.mxu0 %v92
    %355 = vmatpush1.msra.mxu0 %v91
    %356 = vmatprep.subr.mxu0 %v96
    %357 = vmatpush1.msra.mxu0 %v95
    %358 = vmatprep.subr.mxu0 %v100
    %359 = vmatpush1.msra.mxu0 %v99
    %360 = vmatprep.subr.mxu0 %v104
    %361 = vmatpush1.msra.mxu0 %v103
    %362 = vmatprep.subr.mxu0 %v108
    %363 = vmatpush1.msra.mxu0 %v107
    %364 = vmatprep.subr.mxu0 %v112
    %365 = vmatpush1.msra.mxu0 %v111
    %366 = vmatprep.subr.mxu0 %v116
    %367 = vmatpush1.msra.mxu0 %v115
    %368 = vmatprep.subr.mxu0 %v120
    %369 = vmatpush1.msra.mxu0 %v119
    %370 = vmatprep.subr.mxu0 %v124
    %371 = vmatpush1.msra.mxu0 %v123
    %372 = vmatprep.subr.mxu0 %v128
    %373 = vmatpush1.msra.mxu0 %v127
    %374 = vmatprep.subr.mxu0 %v132
    %375 = vmatpush1.msra.mxu0 %v131
    %376 = vmatprep.subr.mxu0 %v136
    %377 = vmatpush1.msra.mxu0 %v135
    %378 = vmatprep.subr.mxu0 0.0
    %379 = vmatpush1.msra.mxu0 0.0
    %380 = vmatprep.subr.mxu0 0.0
    %381 = vmatpush1.msra.mxu0 0.0
    %382 = vmatprep.subr.mxu0 0.0
    %383 = vmatpush1.msra.mxu0 0.0
    %384 = vmatprep.subr.mxu0 0.0
    %385 = vmatpush1.msra.mxu0 0.0
    %386 = vmatprep.subr.mxu0 0.0
    %387 = vmatpush1.msra.mxu0 0.0
    %388 = vmatprep.subr.mxu0 0.0
    %389 = vmatpush1.msra.mxu0 0.0
    %390 = vmatprep.subr.mxu0 0.0
    %391 = vmatpush1.msra.mxu0 0.0
    %392 = vmatprep.subr.mxu0 0.0
    %393 = vmatpush1.msra.mxu0 0.0
    %394 = vmatprep.subr.mxu0 0.0
    %395 = vmatpush1.msra.mxu0 0.0
    %396 = vmatprep.subr.mxu0 0.0
    %397 = vmatpush1.msra.mxu0 0.0
    %398 = vmatprep.subr.mxu0 0.0
    %399 = vmatpush1.msra.mxu0 0.0
    %400 = vmatprep.subr.mxu0 0.0
    %401 = vmatpush1.msra.mxu0 0.0
    %402 = vmatprep.subr.mxu0 0.0
    %403 = vmatpush1.msra.mxu0 0.0
    %404 = vmatprep.subr.mxu0 0.0
    %405 = vmatpush1.msra.mxu0 0.0
    %406 = vmatprep.subr.mxu0 0.0
    %407 = vmatpush1.msra.mxu0 0.0
    %408 = vmatprep.subr.mxu0 0.0
    %409 = vmatpush1.msra.mxu0 0.0
    %410 = vmatprep.mubr.f32.mxu0 0.0
    %411 = vmatmul.mubr.f32.gmra.mrb[0].mxu0 %v74
    %v412 = vpop.f32.mrb[0].mxu0
    %v413 = vadd.f32 %v271, %v412
    %v414 = vpop.f32.mrb[0].mxu0
    %v415 = vadd.f32 %v273, %v414
    %416 = vdwg.mxu0
    %417 = vmatprep.subr.mxu0 %v78
    %418 = vmatpush1.msra.mxu0 %v77
    %419 = vmatprep.subr.mxu0 %v82
    %420 = vmatpush1.msra.mxu0 %v81
    %421 = vmatprep.subr.mxu0 %v86
    %422 = vmatpush1.msra.mxu0 %v85
    %423 = vmatprep.subr.mxu0 %v90
    %424 = vmatpush1.msra.mxu0 %v89
    %425 = vmatprep.subr.mxu0 %v94
    %426 = vmatpush1.msra.mxu0 %v93
    %427 = vmatprep.subr.mxu0 %v98
    %428 = vmatpush1.msra.mxu0 %v97
    %429 = vmatprep.subr.mxu0 %v102
    %430 = vmatpush1.msra.mxu0 %v101
    %431 = vmatprep.subr.mxu0 %v106
    %432 = vmatpush1.msra.mxu0 %v105
    %433 = vmatprep.subr.mxu0 %v110
    %434 = vmatpush1.msra.mxu0 %v109
    %435 = vmatprep.subr.mxu0 %v114
    %436 = vmatpush1.msra.mxu0 %v113
    %437 = vmatprep.subr.mxu0 %v118
    %438 = vmatpush1.msra.mxu0 %v117
    %439 = vmatprep.subr.mxu0 %v122
    %440 = vmatpush1.msra.mxu0 %v121
    %441 = vmatprep.subr.mxu0 %v126
    %442 = vmatpush1.msra.mxu0 %v125
    %443 = vmatprep.subr.mxu0 %v130
    %444 = vmatpush1.msra.mxu0 %v129
    %445 = vmatprep.subr.mxu0 %v134
    %446 = vmatpush1.msra.mxu0 %v133
    %447 = vmatprep.subr.mxu0 %v138
    %448 = vmatpush1.msra.mxu0 %v137
    %449 = vmatprep.subr.mxu0 0.0
    %450 = vmatpush1.msra.mxu0 0.0
    %451 = vmatprep.subr.mxu0 0.0
    %452 = vmatpush1.msra.mxu0 0.0
    %453 = vmatprep.subr.mxu0 0.0
    %454 = vmatpush1.msra.mxu0 0.0
    %455 = vmatprep.subr.mxu0 0.0
    %456 = vmatpush1.msra.mxu0 0.0
    %457 = vmatprep.subr.mxu0 0.0
    %458 = vmatpush1.msra.mxu0 0.0
    %459 = vmatprep.subr.mxu0 0.0
    %460 = vmatpush1.msra.mxu0 0.0
    %461 = vmatprep.subr.mxu0 0.0
    %462 = vmatpush1.msra.mxu0 0.0
    %463 = vmatprep.subr.mxu0 0.0
    %464 = vmatpush1.msra.mxu0 0.0
    %465 = vmatprep.subr.mxu0 0.0
    %466 = vmatpush1.msra.mxu0 0.0
    %467 = vmatprep.subr.mxu0 0.0
    %468 = vmatpush1.msra.mxu0 0.0
    %469 = vmatprep.subr.mxu0 0.0
    %470 = vmatpush1.msra.mxu0 0.0
    %471 = vmatprep.subr.mxu0 0.0
    %472 = vmatpush1.msra.mxu0 0.0
    %473 = vmatprep.subr.mxu0 0.0
    %474 = vmatpush1.msra.mxu0 0.0
    %475 = vmatprep.subr.mxu0 0.0
    %476 = vmatpush1.msra.mxu0 0.0
    %477 = vmatprep.subr.mxu0 0.0
    %478 = vmatpush1.msra.mxu0 0.0
    %479 = vmatprep.subr.mxu0 0.0
    %480 = vmatpush1.msra.mxu0 0.0
    %481 = vmatprep.mubr.f32.mxu0 0.0
    %482 = vmatmul.mubr.f32.gmra.mrb[0].mxu0 %v74
    %v483 = vpop.f32.mrb[0].mxu0
    %v484 = vadd.f32 %v342, %v483
    %v485 = vpop.f32.mrb[0].mxu0
    %v486 = vadd.f32 %v344, %v485
    %487 = vdwg.mxu0
    %v488 = vmul.f32 %v413, 0.2
    %v489 = vmul.f32 %v415, 0.2
    %v490 = vmul.f32 %v484, 0.2
    %v491 = vmul.f32 %v486, 0.2
    %v492 = vmax.f32 %v413, %v488
    %v493 = vmax.f32 %v415, %v489
    %v494 = vmax.f32 %v484, %v490
    %v495 = vmax.f32 %v486, %v491
    %v496 = vld [vmem:[#allocation8] sm:$0xff]
    %v497 = vld [vmem:[#allocation8 + $0x8] sm:$0xff]
    %v498 = vld [vmem:[#allocation8 + $0x10] sm:$0xff]
    %v499 = vld [vmem:[#allocation8 + $0x18] sm:$0xff]
    %v500 = vld [vmem:[#allocation8 + $0x20] sm:$0xff]
    %v501 = vld [vmem:[#allocation8 + $0x28] sm:$0xff]
    %v502 = vld [vmem:[#allocation8 + $0x30] sm:$0xff]
    %v503 = vld [vmem:[#allocation8 + $0x38] sm:$0xff]
    %v504 = vld [vmem:[#allocation8 + $0x40] sm:$0xff]
    %v505 = vld [vmem:[#allocation8 + $0x48] sm:$0xff]
    %v506 = vld [vmem:[#allocation8 + $0x50] sm:$0xff]
    %v507 = vld [vmem:[#allocation8 + $0x58] sm:$0xff]
    %v508 = vld [vmem:[#allocation8 + $0x60] sm:$0xff]
    %v509 = vld [vmem:[#allocation8 + $0x68] sm:$0xff]
    %v510 = vld [vmem:[#allocation8 + $0x70] sm:$0xff]
    %v511 = vld [vmem:[#allocation8 + $0x78] sm:$0xff]
    %v512 = vld [vmem:[#allocation8 + $0x80] sm:$0xff]
    %v513 = vld [vmem:[#allocation8 + $0x88] sm:$0xff]
    %v514 = vld [vmem:[#allocation8 + $0x90] sm:$0xff]
    %v515 = vld [vmem:[#allocation8 + $0x98] sm:$0xff]
    %v516 = vld [vmem:[#allocation8 + $0xa0] sm:$0xff]
    %v517 = vld [vmem:[#allocation8 + $0xa8] sm:$0xff]
    %v518 = vld [vmem:[#allocation8 + $0xb0] sm:$0xff]
    %v519 = vld [vmem:[#allocation8 + $0xb8] sm:$0xff]
    %v520 = vld [vmem:[#allocation8 + $0xc0] sm:$0xff]
    %v521 = vld [vmem:[#allocation8 + $0xc8] sm:$0xff]
    %v522 = vld [vmem:[#allocation8 + $0xd0] sm:$0xff]
    %v523 = vld [vmem:[#allocation8 + $0xd8] sm:$0xff]
    %v524 = vld [vmem:[#allocation8 + $0xe0] sm:$0xff]
    %v525 = vld [vmem:[#allocation8 + $0xe8] sm:$0xff]
    %v526 = vld [vmem:[#allocation8 + $0xf0] sm:$0xff]
    %v527 = vld [vmem:[#allocation8 + $0xf8] sm:$0xff]
    %v528 = vld [vmem:[#allocation8 + $0x100] sm:$0xff]
    %v529 = vld [vmem:[#allocation8 + $0x108] sm:$0xff]
    %v530 = vld [vmem:[#allocation8 + $0x110] sm:$0xff]
    %v531 = vld [vmem:[#allocation8 + $0x118] sm:$0xff]
    %v532 = vld [vmem:[#allocation8 + $0x120] sm:$0xff]
    %v533 = vld [vmem:[#allocation8 + $0x128] sm:$0xff]
    %v534 = vld [vmem:[#allocation8 + $0x130] sm:$0xff]
    %v535 = vld [vmem:[#allocation8 + $0x138] sm:$0xff]
    %v536 = vld [vmem:[#allocation8 + $0x140] sm:$0xff]
    %v537 = vld [vmem:[#allocation8 + $0x148] sm:$0xff]
    %v538 = vld [vmem:[#allocation8 + $0x150] sm:$0xff]
    %v539 = vld [vmem:[#allocation8 + $0x158] sm:$0xff]
    %v540 = vld [vmem:[#allocation8 + $0x160] sm:$0xff]
    %v541 = vld [vmem:[#allocation8 + $0x168] sm:$0xff]
    %v542 = vld [vmem:[#allocation8 + $0x170] sm:$0xff]
    %v543 = vld [vmem:[#allocation8 + $0x178] sm:$0xff]
    %v544 = vld [vmem:[#allocation8 + $0x180] sm:$0xff]
    %v545 = vld [vmem:[#allocation8 + $0x188] sm:$0xff]
    %v546 = vld [vmem:[#allocation8 + $0x190] sm:$0xff]
    %v547 = vld [vmem:[#allocation8 + $0x198] sm:$0xff]
    %v548 = vld [vmem:[#allocation8 + $0x1a0] sm:$0xff]
    %v549 = vld [vmem:[#allocation8 + $0x1a8] sm:$0xff]
    %v550 = vld [vmem:[#allocation8 + $0x1b0] sm:$0xff]
    %v551 = vld [vmem:[#allocation8 + $0x1b8] sm:$0xff]
    %v552 = vld [vmem:[#allocation8 + $0x1c0] sm:$0xff]
    %v553 = vld [vmem:[#allocation8 + $0x1c8] sm:$0xff]
    %v554 = vld [vmem:[#allocation8 + $0x1d0] sm:$0xff]
    %v555 = vld [vmem:[#allocation8 + $0x1d8] sm:$0xff]
    %v556 = vld [vmem:[#allocation8 + $0x1e0] sm:$0xff]
    %v557 = vld [vmem:[#allocation8 + $0x1e8] sm:$0xff]
    %v558 = vld [vmem:[#allocation8 + $0x1f0] sm:$0xff]
    %v559 = vld [vmem:[#allocation8 + $0x1f8] sm:$0xff]
    %560 = vmatprep.subr.mxu0 0.0
    %561 = vmatpush1.msra.mxu0 %v496
    %562 = vmatprep.subr.mxu0 0.0
    %563 = vmatpush1.msra.mxu0 %v497
    %564 = vmatprep.subr.mxu0 0.0
    %565 = vmatpush1.msra.mxu0 %v498
    %566 = vmatprep.subr.mxu0 0.0
    %567 = vmatpush1.msra.mxu0 %v499
    %568 = vmatprep.subr.mxu0 0.0
    %569 = vmatpush1.msra.mxu0 %v500
    %570 = vmatprep.subr.mxu0 0.0
    %571 = vmatpush1.msra.mxu0 %v501
    %572 = vmatprep.subr.mxu0 0.0
    %573 = vmatpush1.msra.mxu0 %v502
    %574 = vmatprep.subr.mxu0 0.0
    %575 = vmatpush1.msra.mxu0 %v503
    %576 = vmatprep.subr.mxu0 0.0
    %577 = vmatpush1.msra.mxu0 %v504
    %578 = vmatprep.subr.mxu0 0.0
    %579 = vmatpush1.msra.mxu0 %v505
    %580 = vmatprep.subr.mxu0 0.0
    %581 = vmatpush1.msra.mxu0 %v506
    %582 = vmatprep.subr.mxu0 0.0
    %583 = vmatpush1.msra.mxu0 %v507
    %584 = vmatprep.subr.mxu0 0.0
    %585 = vmatpush1.msra.mxu0 %v508
    %586 = vmatprep.subr.mxu0 0.0
    %587 = vmatpush1.msra.mxu0 %v509
    %588 = vmatprep.subr.mxu0 0.0
    %589 = vmatpush1.msra.mxu0 %v510
    %590 = vmatprep.subr.mxu0 0.0
    %591 = vmatpush1.msra.mxu0 %v511
    %592 = vmatprep.subr.mxu0 0.0
    %593 = vmatpush1.msra.mxu0 %v512
    %594 = vmatprep.subr.mxu0 0.0
    %595 = vmatpush1.msra.mxu0 %v513
    %596 = vmatprep.subr.mxu0 0.0
    %597 = vmatpush1.msra.mxu0 %v514
    %598 = vmatprep.subr.mxu0 0.0
    %599 = vmatpush1.msra.mxu0 %v515
    %600 = vmatprep.subr.mxu0 0.0
    %601 = vmatpush1.msra.mxu0 %v516
    %602 = vmatprep.subr.mxu0 0.0
    %603 = vmatpush1.msra.mxu0 %v517
    %604 = vmatprep.subr.mxu0 0.0
    %605 = vmatpush1.msra.mxu0 %v518
    %606 = vmatprep.subr.mxu0 0.0
    %607 = vmatpush1.msra.mxu0 %v519
    %608 = vmatprep.subr.mxu0 0.0
    %609 = vmatpush1.msra.mxu0 %v520
    %610 = vmatprep.subr.mxu0 0.0
    %611 = vmatpush1.msra.mxu0 %v521
    %612 = vmatprep.subr.mxu0 0.0
    %613 = vmatpush1.msra.mxu0 %v522
    %614 = vmatprep.subr.mxu0 0.0
    %615 = vmatpush1.msra.mxu0 %v523
    %616 = vmatprep.subr.mxu0 0.0
    %617 = vmatpush1.msra.mxu0 %v524
    %618 = vmatprep.subr.mxu0 0.0
    %619 = vmatpush1.msra.mxu0 %v525
    %620 = vmatprep.subr.mxu0 0.0
    %621 = vmatpush1.msra.mxu0 %v526
    %622 = vmatprep.subr.mxu0 0.0
    %623 = vmatpush1.msra.mxu0 %v527
    %624 = vmatprep.mubr.f32.mxu0 %v493
    %625 = vmatmul.mubr.f32.gmra.mrb[0].mxu0 %v492
    %v626 = vpop.f32.mrb[0].mxu0
    %v627 = vadd.f32 0.0, %v626
    %v628 = vpop.f32.mrb[0].mxu0
    %629 = vdwg.mxu0
    %630 = vmatprep.subr.mxu0 0.0
    %631 = vmatpush1.msra.mxu0 %v528
    %632 = vmatprep.subr.mxu0 0.0
    %633 = vmatpush1.msra.mxu0 %v529
    %634 = vmatprep.subr.mxu0 0.0
    %635 = vmatpush1.msra.mxu0 %v530
    %636 = vmatprep.subr.mxu0 0.0
    %637 = vmatpush1.msra.mxu0 %v531
    %638 = vmatprep.subr.mxu0 0.0
    %639 = vmatpush1.msra.mxu0 %v532
    %640 = vmatprep.subr.mxu0 0.0
    %641 = vmatpush1.msra.mxu0 %v533
    %642 = vmatprep.subr.mxu0 0.0
    %643 = vmatpush1.msra.mxu0 %v534
    %644 = vmatprep.subr.mxu0 0.0
    %645 = vmatpush1.msra.mxu0 %v535
    %646 = vmatprep.subr.mxu0 0.0
    %647 = vmatpush1.msra.mxu0 %v536
    %648 = vmatprep.subr.mxu0 0.0
    %649 = vmatpush1.msra.mxu0 %v537
    %650 = vmatprep.subr.mxu0 0.0
    %651 = vmatpush1.msra.mxu0 %v538
    %652 = vmatprep.subr.mxu0 0.0
    %653 = vmatpush1.msra.mxu0 %v539
    %654 = vmatprep.subr.mxu0 0.0
    %655 = vmatpush1.msra.mxu0 %v540
    %656 = vmatprep.subr.mxu0 0.0
    %657 = vmatpush1.msra.mxu0 %v541
    %658 = vmatprep.subr.mxu0 0.0
    %659 = vmatpush1.msra.mxu0 %v542
    %660 = vmatprep.subr.mxu0 0.0
    %661 = vmatpush1.msra.mxu0 %v543
    %662 = vmatprep.subr.mxu0 0.0
    %663 = vmatpush1.msra.mxu0 %v544
    %664 = vmatprep.subr.mxu0 0.0
    %665 = vmatpush1.msra.mxu0 %v545
    %666 = vmatprep.subr.mxu0 0.0
    %667 = vmatpush1.msra.mxu0 %v546
    %668 = vmatprep.subr.mxu0 0.0
    %669 = vmatpush1.msra.mxu0 %v547
    %670 = vmatprep.subr.mxu0 0.0
    %671 = vmatpush1.msra.mxu0 %v548
    %672 = vmatprep.subr.mxu0 0.0
    %673 = vmatpush1.msra.mxu0 %v549
    %674 = vmatprep.subr.mxu0 0.0
    %675 = vmatpush1.msra.mxu0 %v550
    %676 = vmatprep.subr.mxu0 0.0
    %677 = vmatpush1.msra.mxu0 %v551
    %678 = vmatprep.subr.mxu0 0.0
    %679 = vmatpush1.msra.mxu0 %v552
    %680 = vmatprep.subr.mxu0 0.0
    %681 = vmatpush1.msra.mxu0 %v553
    %682 = vmatprep.subr.mxu0 0.0
    %683 = vmatpush1.msra.mxu0 %v554
    %684 = vmatprep.subr.mxu0 0.0
    %685 = vmatpush1.msra.mxu0 %v555
    %686 = vmatprep.subr.mxu0 0.0
    %687 = vmatpush1.msra.mxu0 %v556
    %688 = vmatprep.subr.mxu0 0.0
    %689 = vmatpush1.msra.mxu0 %v557
    %690 = vmatprep.subr.mxu0 0.0
    %691 = vmatpush1.msra.mxu0 %v558
    %692 = vmatprep.subr.mxu0 0.0
    %693 = vmatpush1.msra.mxu0 %v559
    %694 = vmatprep.mubr.f32.mxu0 %v495
    %695 = vmatmul.mubr.f32.gmra.mrb[0].mxu0 %v494
    %v696 = vpop.f32.mrb[0].mxu0
    %v697 = vadd.f32 %v627, %v696
    %v698 = vpop.f32.mrb[0].mxu0
    %699 = vdwg.mxu0
    %v700 = vtanh.pop %v697
    %v701 = vadd.f32 %v74, %v700
    %702 = vst [vmem:[#allocation10] sm:$0x1] %v701
    // Predicated region
    $region38: #{tpu_custom_call.1} parent=1 // pred_check
      _
    $region39: #{tpu_custom_call.1} parent=1 // pred_check_branch
      %704 = sbr.rel (0) target = $region41
    $region40: #{tpu_custom_call.1} parent=1 // pred_region
      %s706 = ssub.s32 16, 16
      %707 = vsyncadd [#allocation4], %s706
      %s709 = sshll.u32 [#allocation10], 4
      %s710 = int_to_ptr.vmem [resolvable:$true] %s709
      %712 = dma.vmem_to_hbm [thread:$0]  %s710, 16, %s5, [#allocation4]
    $region41: #{tpu_custom_call.1} parent=1 // pred_fallthru
      _
    // Predicated region
    $region42: #{tpu_custom_call.1} parent=1 // pred_check
      _
    $region43: #{tpu_custom_call.1} parent=1 // pred_check_branch
      %714 = sbr.rel (0) target = $region45
    $region44: #{tpu_custom_call.1} parent=1 // pred_region
      %715 = dma.done [#allocation4], 16
    $region45: #{tpu_custom_call.1} parent=1 // pred_fallthru
      _
    %716 = vsyncpa [#allocation3], 1
    %717 = vsyncpa [#allocation6], 1
    %718 = vsyncpa [#allocation9], 1
    %719 = vsyncpa [#allocation4], 1

</llo_original>
